<compile_context>
chip_gen: v7x
topology: tpu7x:2x2x1
jax: 0.10.0
libtpu: 0.0.40
codegen_flags: <defaults>
</compile_context>

<pallas_src>
import jax
import jax.numpy as jnp
from jax.experimental import pallas as pl
from jax.experimental.pallas import tpu as pltpu

_LANES = 128        # vreg lane width
_SUBLANES = 8       # f32 sublane count
_ROW_TILE = 256     # 256 x 128 x 4 B = 128 KiB per block per buffer


# ---------------------------------------------------------------------------
# Layout helpers: flatten any shape into a lane-dense (rows_pad, 128) slab.
# ---------------------------------------------------------------------------
def _plan(total_elems):
    rows = -(-total_elems // _LANES)
    if rows <= _ROW_TILE:
        rows_pad = max(_SUBLANES, -(-rows // _SUBLANES) * _SUBLANES)
        return rows_pad, rows_pad, 1                      # single grid step
    rows_pad = -(-rows // _ROW_TILE) * _ROW_TILE
    return rows_pad, _ROW_TILE, rows_pad // _ROW_TILE


def _to_lane_dense(x, rows_pad):
    flat = x.reshape(-1)
    pad = rows_pad * _LANES - flat.size
    if pad:
        flat = jnp.concatenate([flat, jnp.zeros((pad,), flat.dtype)])
    return flat.reshape(rows_pad, _LANES)


def _from_lane_dense(y2d, shape, size):
    return y2d.reshape(-1)[:size].reshape(shape)


# ---------------------------------------------------------------------------
# Kernels.
# ---------------------------------------------------------------------------
def _add_kernel(y_ref, x_ref, o_ref):
    # generic path: fn(x) was computed outside; fuse only the residual add.
    o_ref[...] = y_ref[...] + x_ref[...]


def _make_fused_kernel(fn):
    # fused path: fn is elementwise / block-local, trace it inside the kernel
    # so fn(x) never round-trips HBM.
    def kernel(x_ref, o_ref):
        x = x_ref[...]
        o_ref[...] = fn(x) + x
    return kernel


# ---------------------------------------------------------------------------
# pallas_call wrappers.
# ---------------------------------------------------------------------------
def _residual_add_generic(y, x):
    assert y.shape == x.shape and y.dtype == x.dtype
    rows_pad, block_rows, grid = _plan(x.size)
    x2d = _to_lane_dense(x, rows_pad)
    y2d = _to_lane_dense(y, rows_pad)
    spec = pl.BlockSpec((block_rows, _LANES), lambda i: (i, 0))
    out = pl.pallas_call(
        _add_kernel,
        out_shape=jax.ShapeDtypeStruct((rows_pad, _LANES), x.dtype),
        grid_spec=pltpu.PrefetchScalarGridSpec(
            num_scalar_prefetch=0,
            grid=(grid,),
            in_specs=[spec, spec],
            out_specs=spec,
        ),
        compiler_params=pltpu.CompilerParams(
            dimension_semantics=("parallel",)),
    )(y2d, x2d)
    return _from_lane_dense(out, x.shape, x.size)


def _residual_add_fused(fn, x):
    rows_pad, block_rows, grid = _plan(x.size)
    x2d = _to_lane_dense(x, rows_pad)
    spec = pl.BlockSpec((block_rows, _LANES), lambda i: (i, 0))
    out = pl.pallas_call(
        _make_fused_kernel(fn),
        out_shape=jax.ShapeDtypeStruct((rows_pad, _LANES), x.dtype),
        grid_spec=pltpu.PrefetchScalarGridSpec(
            num_scalar_prefetch=0,
            grid=(grid,),
            in_specs=[spec],
            out_specs=spec,
        ),
        compiler_params=pltpu.CompilerParams(
            dimension_semantics=("parallel",)),
    )(x2d)
    return _from_lane_dense(out, x.shape, x.size)


# ---------------------------------------------------------------------------
# Module-equivalent wrapper.
# ---------------------------------------------------------------------------
class ResidualAdd:
    """JAX/Pallas port of the PyTorch ResidualAdd module: out = fn(x) + x.

    fn          : callable with fn(x, **kwargs).shape == x.shape.
    elementwise : True if fn is elementwise / block-local, in which case it is
                  fused into the residual-add kernel (single pallas_call, no
                  HBM roundtrip of the intermediate fn(x)).
    """

    def __init__(self, fn, *, elementwise=False):
        self.fn = fn
        self.elementwise = elementwise

    def __call__(self, x, **kwargs):
        if self.elementwise and not kwargs:
            return _residual_add_fused(self.fn, x)
        # TODO(synk): self.fn is an arbitrary user submodule with no universal
        # Pallas lowering; the non-elementwise path evaluates fn in plain JAX
        # and only the residual add runs as a Pallas kernel.
        y = self.fn(x, **kwargs)
        return _residual_add_generic(y, x)


# ---------------------------------------------------------------------------
# Demo / self-check.
# ---------------------------------------------------------------------------
if __name__ == "__main__":
    key = jax.random.PRNGKey(0)
    kx, kw, kb = jax.random.split(key, 3)
    B, N, E = 2, 8, 32                       # (batch, seq, hidden)
    x = jax.random.normal(kx, (B, N, E), jnp.float32)

    # Path 1: elementwise sublayer -> fully fused into one pallas_call.
    fn1 = jax.nn.gelu
    block1 = ResidualAdd(fn1, elementwise=True)
    out1 = jax.block_until_ready(block1(x))
    assert out1.shape == x.shape, out1.shape
    ref1 = fn1(x) + x
    if not jnp.allclose(out1, ref1, atol=1e-5, rtol=1e-5):
        raise AssertionError("fused ResidualAdd does not match reference")

    # Path 2: generic submodule (per-token linear) -> fn in JAX, add in Pallas.
    w = 0.1 * jax.random.normal(kw, (E, E), jnp.float32)
    b = 0.1 * jax.random.normal(kb, (E,), jnp.float32)
    fn2 = lambda v: jnp.dot(v, w) + b
    block2 = ResidualAdd(fn2, elementwise=False)
    out2 = jax.block_until_ready(block2(x))
    assert out2.shape == x.shape, out2.shape
    ref2 = fn2(x) + x
    if not jnp.allclose(out2, ref2, atol=1e-5, rtol=1e-5):
        raise AssertionError("generic ResidualAdd does not match reference")

    print("KERNEL_OK")
</pallas_src>

<mosaic_0001>
module attributes {stable_mosaic.version = 11 : i64} {
  func.func @kernel(%arg0: i32, %arg1: memref<8x128xf32, #tpu.memory_space<vmem>>, %arg2: memref<8x128xf32, #tpu.memory_space<vmem>>) attributes {dimension_semantics = [#tpu.dimension_semantics<parallel>], iteration_bounds = array<i64: 1>, scalar_prefetch = 0 : i64, scratch_operands = 0 : i64, tpu.core_type = #tpu.core_type<tc>, window_params = [{transform_indices = @transform_0, window_bounds = array<i64: 8, 128>}, {transform_indices = @transform_1, window_bounds = array<i64: 8, 128>}]} {
    %c0 = arith.constant 0 : index
    %c0_0 = arith.constant 0 : index
    %0 = vector.load %arg1[%c0, %c0_0] : memref<8x128xf32, #tpu.memory_space<vmem>>, vector<8x128xf32>
    %1 = arith.mulf %0, %0 : vector<8x128xf32>
    %2 = arith.mulf %0, %1 : vector<8x128xf32>
    %cst = arith.constant 4.471500e-02 : f32
    %3 = vector.broadcast %cst : f32 to vector<8x128xf32>
    %4 = arith.mulf %3, %2 : vector<8x128xf32>
    %5 = arith.addf %0, %4 : vector<8x128xf32>
    %cst_1 = arith.constant 0.797884583 : f32
    %6 = vector.broadcast %cst_1 : f32 to vector<8x128xf32>
    %7 = arith.mulf %6, %5 : vector<8x128xf32>
    %8 = math.tanh %7 : vector<8x128xf32>
    %cst_2 = arith.constant 1.000000e+00 : f32
    %9 = vector.broadcast %cst_2 : f32 to vector<8x128xf32>
    %10 = arith.addf %9, %8 : vector<8x128xf32>
    %cst_3 = arith.constant 5.000000e-01 : f32
    %11 = vector.broadcast %cst_3 : f32 to vector<8x128xf32>
    %12 = arith.mulf %11, %10 : vector<8x128xf32>
    %13 = arith.mulf %0, %12 : vector<8x128xf32>
    %14 = arith.addf %13, %0 : vector<8x128xf32>
    %c0_4 = arith.constant 0 : index
    %c0_5 = arith.constant 0 : index
    %15 = vector.load %arg2[%c0_4, %c0_5] : memref<8x128xf32, #tpu.memory_space<vmem>>, vector<8x128xf32>
    tpu.vector_store %arg2[%c0_4, %c0_5], %14 {strides = array<i32>} : memref<8x128xf32, #tpu.memory_space<vmem>>, vector<8x128xf32>,
    return
  }
  func.func @transform_0(%arg0: i32) -> (i32, i32) {
    %c0_i32 = arith.constant 0 : i32
    %c0_i32_0 = arith.constant 0 : i32
    return %arg0, %c0_i32 : i32, i32
  }
  func.func @transform_1(%arg0: i32) -> (i32, i32) {
    %c0_i32 = arith.constant 0 : i32
    %c0_i32_0 = arith.constant 0 : i32
    return %arg0, %c0_i32 : i32, i32
  }
}

</mosaic_0001>

<llo_original>
// kernel: tpu_custom_call.1
$region0: #{tpu_custom_call.1}
  #allocation0 [shape = 'u32[]', space=smem, size = 0x4, offset = 0x4, fixed_abs, tag = 'smem constant byte address 0x4 - core index']
  #allocation1 [shape = 'u32[144,128]{1,0:T(1,128)}', space=vmem, size = 0x12000, scoped, tag = 'internal scratch']
  %s0 = inlined_call_operand.hbm [shape: f32[8,128], index: 0, kind: input, shape index: {}]
  %s1 = inlined_call_operand.hbm [shape: f32[8,128], index: 1, kind: output, shape index: {}]
  %s2 = sld [smem:[#allocation0]]
  $region18: #{tpu_custom_call.1} parent=0
    _
  %s4 = ssub.s32 1, %s2
  %s5 = scalar_select 0, %s4, %s2
  $region1: #{tpu_custom_call.1} parent=0
    #allocation2 [shape = 'u8[4096]{0}', space=vmem, size = 0x1000, scoped, tag = 'input window, operand 0, single buffered']
    #allocation3 [shape = 's32[1]{0}', space=sflag, size = 0x4, scoped, tag = 'scoped memory for tpu_custom_call.1']
    #allocation4 [shape = 's32[1]{0}', space=sflag, size = 0x4, scoped, tag = 'scoped memory for tpu_custom_call.1']
    #allocation5 [shape = 'u8[4096]{0}', space=vmem, size = 0x1000, scoped, tag = 'output window, operand 0, single buffered']
    %6 = vsyncpa [#allocation3], 0
    %7 = vsyncpa [#allocation4], 0
    // Predicated region
    $region2: #{tpu_custom_call.1} parent=1 // pred_check
      _
    $region3: #{tpu_custom_call.1} parent=1 // pred_check_branch
      %9 = sbr.rel (0) target = $region5
    $region4: #{tpu_custom_call.1} parent=1 // pred_region
      %s11 = ssub.s32 128, 128
      %12 = vsyncadd [#allocation3], %s11
      %s14 = sshll.u32 [#allocation2], 4
      %s15 = int_to_ptr.vmem [resolvable:$true] %s14
      %17 = dma.hbm_to_vmem [thread:$0]  %s0, 128, %s15, [#allocation3]
    $region5: #{tpu_custom_call.1} parent=1 // pred_fallthru
      _
    // Predicated region
    $region6: #{tpu_custom_call.1} parent=1 // pred_check
      _
    $region7: #{tpu_custom_call.1} parent=1 // pred_check_branch
      %19 = sbr.rel (0) target = $region9
    $region8: #{tpu_custom_call.1} parent=1 // pred_region
      %20 = dma.done [#allocation3], 128
    $region9: #{tpu_custom_call.1} parent=1 // pred_fallthru
      _
    %v21 = vld [vmem:[#allocation2] sm:$0xff]
    %v22 = vmul.f32 %v21, %v21
    %v23 = vmul.f32 %v21, %v22
    %v24 = vmul.f32 %v23, 0.044715
    %v25 = vadd.f32 %v21, %v24
    %v26 = vmul.f32 %v25, 0.7978846
    %v27 = vtanh.pop %v26
    %v28 = vadd.f32 %v27, 1.0
    %v29 = vmul.f32 %v28, 0.5
    %v30 = vmul.f32 %v21, %v29
    %v31 = vadd.f32 %v30, %v21
    %32 = vst [vmem:[#allocation5] sm:$0xff] %v31
    // Predicated region
    $region10: #{tpu_custom_call.1} parent=1 // pred_check
      _
    $region11: #{tpu_custom_call.1} parent=1 // pred_check_branch
      %34 = sbr.rel (0) target = $region13
    $region12: #{tpu_custom_call.1} parent=1 // pred_region
      %s36 = ssub.s32 128, 128
      %37 = vsyncadd [#allocation4], %s36
      %s39 = sshll.u32 [#allocation5], 4
      %s40 = int_to_ptr.vmem [resolvable:$true] %s39
      %42 = dma.vmem_to_hbm [thread:$0]  %s40, 128, %s1, [#allocation4]
    $region13: #{tpu_custom_call.1} parent=1 // pred_fallthru
      _
    // Predicated region
    $region14: #{tpu_custom_call.1} parent=1 // pred_check
      _
    $region15: #{tpu_custom_call.1} parent=1 // pred_check_branch
      %44 = sbr.rel (0) target = $region17
    $region16: #{tpu_custom_call.1} parent=1 // pred_region
      %45 = dma.done [#allocation4], 128
    $region17: #{tpu_custom_call.1} parent=1 // pred_fallthru
      _
    %46 = vsyncpa [#allocation3], 1
    %47 = vsyncpa [#allocation4], 1

</llo_original>
